<compile_context>
chip_gen: v7x
topology: tpu7x:2x2x1
jax: 0.10.0
libtpu: 0.0.40
codegen_flags: <defaults>
</compile_context>

<pallas_src>
import functools

import jax
import jax.numpy as jnp
import numpy as np
from jax.experimental import pallas as pl
from jax.experimental.pallas import tpu as pltpu

_EPSILON = 1e-5
_LANES = 128
_NUM_CORE_SPLITS = 2   # leading "parallel" grid axis; shards across v7x's 2 TCs


def _cdiv(a: int, b: int) -> int:
    return (a + b - 1) // b


def _round_up(x: int, m: int) -> int:
    return _cdiv(x, m) * m


def _dc_loss_kernel(pred_ref, targ_ref, dsum_ref, esum_ref, *,
                    n_valid, tiles_per_core):
    c = pl.program_id(0)            # core-split index  ("parallel")
    r = pl.program_id(1)            # row-tile index within this core ("arbitrary")
    _, row_tile, lanes = pred_ref.shape

    @pl.when(r == 0)
    def _init():
        dsum_ref[...] = jnp.zeros_like(dsum_ref)
        esum_ref[...] = jnp.zeros_like(esum_ref)

    pred = pred_ref[...].astype(jnp.float32)     # (B, row_tile, 128)
    targ = targ_ref[...].astype(jnp.float32)

    # Batch axis is the leading dim -> these reductions are plain VPU adds.
    diff = jnp.sum(targ - pred, axis=0)          # (row_tile, 128)  sum_B (t - p)
    ener = jnp.sum(targ * targ, axis=0)          # (row_tile, 128)  sum_B t^2

    # Global flattened element offset (per batch row) of this tile.  Uses the
    # UNCLAMPED block index so duplicate/over-run tiles contribute exactly 0.
    start = (c * tiles_per_core + r) * (row_tile * lanes)
    needs_mask = start + row_tile * lanes > n_valid

    def _accumulate(d2, ev):
        # Fold (row_tile,128) -> (8,128): vreg-aligned reshape, pure VPU adds.
        dsum_ref[0] += jnp.sum(d2.reshape(-1, 8, lanes), axis=0)
        esum_ref[0] += jnp.sum(ev.reshape(-1, 8, lanes), axis=0)

    @pl.when(jnp.logical_not(needs_mask))
    def _full_tile():
        _accumulate(diff * diff, ener)

    @pl.when(needs_mask)
    def _tail_tile():
        idx = (start
               + jax.lax.broadcasted_iota(jnp.int32, (row_tile, lanes), 0) * lanes
               + jax.lax.broadcasted_iota(jnp.int32, (row_tile, lanes), 1))
        valid = idx < n_valid
        d = jnp.where(valid, diff, 0.0)
        e = jnp.where(valid, ener, 0.0)
        _accumulate(d * d, e)


def dc_loss(predict: jax.Array, target: jax.Array, *,
            row_tile: int | None = None,
            block_byte_budget: int = 2 << 20) -> jax.Array:
    """Pallas implementation of DCLoss.forward (pre_emp=False)."""
    assert predict.shape == target.shape, "predict/target shape mismatch"
    assert predict.dtype == target.dtype, "predict/target dtype mismatch"
    B = predict.shape[0]

    # Flatten (B, C, T) -> (B, N); free (bitcast) reshape.
    p2 = predict.reshape(B, -1)
    t2 = target.reshape(B, -1)
    n = p2.shape[1]

    # Re-view as (B, R, 128).  Zero-copy when N % 128 == 0; otherwise pad only
    # to the next multiple of 128 (padded values are masked in-kernel anyway).
    r_rows = _cdiv(n, _LANES)
    n_pad = r_rows * _LANES
    if n_pad != n:
        p2 = jnp.pad(p2, ((0, 0), (0, n_pad - n)))
        t2 = jnp.pad(t2, ((0, 0), (0, n_pad - n)))
    p3 = p2.reshape(B, r_rows, _LANES)
    t3 = t2.reshape(B, r_rows, _LANES)

    itemsize = jnp.dtype(predict.dtype).itemsize
    if row_tile is None:
        # ~block_byte_budget bytes of useful data per input per grid step.
        row_tile = block_byte_budget // (B * _LANES * itemsize)
    row_tile = int(min(max(8, (row_tile // 8) * 8), _round_up(r_rows, 8)))

    total_tiles = _cdiv(r_rows, row_tile)
    tiles_per_core = _cdiv(total_tiles, _NUM_CORE_SPLITS)

    block_bytes = B * row_tile * _LANES * itemsize
    # 2 inputs x 2 pipeline buffers + accumulators/outputs + slack.
    vmem_limit = int(max(32 << 20, 4 * block_bytes + (4 << 20)))

    kernel = functools.partial(
        _dc_loss_kernel, n_valid=n, tiles_per_core=tiles_per_core)

    def in_map(c, r):
        # Clamp so a core never issues a fully out-of-bounds block; the mask
        # (based on the unclamped index) zeroes any duplicated contribution.
        return (0, jnp.minimum(c * tiles_per_core + r, total_tiles - 1), 0)

    out_map = lambda c, r: (c, 0, 0)
    acc_shape = jax.ShapeDtypeStruct((_NUM_CORE_SPLITS, 8, _LANES), jnp.float32)

    dsum, esum = pl.pallas_call(
        kernel,
        out_shape=(acc_shape, acc_shape),
        grid=(_NUM_CORE_SPLITS, tiles_per_core),
        in_specs=[
            pl.BlockSpec((B, row_tile, _LANES), in_map),
            pl.BlockSpec((B, row_tile, _LANES), in_map),
        ],
        out_specs=(
            pl.BlockSpec((1, 8, _LANES), out_map),
            pl.BlockSpec((1, 8, _LANES), out_map),
        ),
        compiler_params=pltpu.CompilerParams(
            dimension_semantics=("parallel", "arbitrary"),
            vmem_limit_bytes=vmem_limit,
        ),
        cost_estimate=pl.CostEstimate(
            flops=6 * B * n,
            transcendentals=0,
            bytes_accessed=2 * B * n_pad * itemsize
            + 2 * _NUM_CORE_SPLITS * 8 * _LANES * 4,
        ),
    )(p3, t3)

    # Tiny epilogue in plain JAX: combine per-core vector partial sums.
    num = jnp.sum(dsum) / (float(B) * float(B) * float(n))
    energy = jnp.sum(esum) / (float(B) * float(n)) + _EPSILON
    return num / energy


def _dc_loss_ref(predict, target):
    # Pure-JAX reference with identical semantics (for sanity check).
    loss = jnp.mean((jnp.mean(target, 0) - jnp.mean(predict, 0)) ** 2)
    energy = jnp.mean(target ** 2) + _EPSILON
    return loss / energy


if __name__ == "__main__":
    key = jax.random.PRNGKey(0)
    k_pred, k_targ = jax.random.split(key)

    # Audio-style shapes; C*T = 4000 -> 32 rows of 128 (96-element ragged tail,
    # exercising the in-kernel mask), 4 row-tiles of 8 -> 2 per core split,
    # exercising multi-step accumulation, init/finalize and both branches.
    B, C, T = 2, 4, 1000
    predict = jax.random.normal(k_pred, (B, C, T), dtype=jnp.float32)
    target = jax.random.normal(k_targ, (B, C, T), dtype=jnp.float32) * 0.5 + 0.1

    out = dc_loss(predict, target, row_tile=8)
    jax.block_until_ready(out)

    ref = _dc_loss_ref(predict, target)
    jax.block_until_ready(ref)

    if np.allclose(np.asarray(out), np.asarray(ref), rtol=1e-4, atol=1e-6):
        print("KERNEL_OK")
    else:
        print("MISMATCH", float(out), float(ref))
</pallas_src>

<mosaic_0001>
module attributes {stable_mosaic.version = 11 : i64} {
  func.func @_dc_loss_kernel(%arg0: i32, %arg1: i32, %arg2: memref<2x8x128xf32, #tpu.memory_space<vmem>>, %arg3: memref<2x8x128xf32, #tpu.memory_space<vmem>>, %arg4: memref<1x8x128xf32, #tpu.memory_space<vmem>>, %arg5: memref<1x8x128xf32, #tpu.memory_space<vmem>>) attributes {dimension_semantics = [#tpu.dimension_semantics<parallel>, #tpu.dimension_semantics<arbitrary>], iteration_bounds = array<i64: 2, 2>, scalar_prefetch = 0 : i64, scratch_operands = 0 : i64, tpu.core_type = #tpu.core_type<tc>, window_params = [{transform_indices = @transform_0, window_bounds = array<i64: 2, 8, 128>}, {transform_indices = @transform_1, window_bounds = array<i64: 2, 8, 128>}, {transform_indices = @transform_2, window_bounds = array<i64: 1, 8, 128>}, {transform_indices = @transform_3, window_bounds = array<i64: 1, 8, 128>}]} {
    %c0_i32 = arith.constant 0 : i32
    %0 = arith.cmpi eq, %arg1, %c0_i32 : i32
    %1 = arith.extui %0 : i1 to i32
    %c0_i32_0 = arith.constant 0 : i32
    %2 = arith.cmpi ne, %1, %c0_i32_0 : i32
    scf.if %2 {
      %cst_10 = arith.constant 0.000000e+00 : f32
      %19 = vector.broadcast %cst_10 : f32 to vector<1x8x128xf32>
      %c0_11 = arith.constant 0 : index
      %c0_12 = arith.constant 0 : index
      %c0_13 = arith.constant 0 : index
      %20 = vector.load %arg4[%c0_11, %c0_12, %c0_13] : memref<1x8x128xf32, #tpu.memory_space<vmem>>, vector<1x8x128xf32>
      tpu.vector_store %arg4[%c0_11, %c0_12, %c0_13], %19 {strides = array<i32>} : memref<1x8x128xf32, #tpu.memory_space<vmem>>, vector<1x8x128xf32>,
      %cst_14 = arith.constant 0.000000e+00 : f32
      %21 = vector.broadcast %cst_14 : f32 to vector<1x8x128xf32>
      %c0_15 = arith.constant 0 : index
      %c0_16 = arith.constant 0 : index
      %c0_17 = arith.constant 0 : index
      %22 = vector.load %arg5[%c0_15, %c0_16, %c0_17] : memref<1x8x128xf32, #tpu.memory_space<vmem>>, vector<1x8x128xf32>
      tpu.vector_store %arg5[%c0_15, %c0_16, %c0_17], %21 {strides = array<i32>} : memref<1x8x128xf32, #tpu.memory_space<vmem>>, vector<1x8x128xf32>,
    } else {
    }
    %c0 = arith.constant 0 : index
    %c0_1 = arith.constant 0 : index
    %c0_2 = arith.constant 0 : index
    %3 = vector.load %arg2[%c0, %c0_1, %c0_2] : memref<2x8x128xf32, #tpu.memory_space<vmem>>, vector<2x8x128xf32>
    %c0_3 = arith.constant 0 : index
    %c0_4 = arith.constant 0 : index
    %c0_5 = arith.constant 0 : index
    %4 = vector.load %arg3[%c0_3, %c0_4, %c0_5] : memref<2x8x128xf32, #tpu.memory_space<vmem>>, vector<2x8x128xf32>
    %5 = arith.subf %4, %3 : vector<2x8x128xf32>
    %cst = arith.constant dense<0.000000e+00> : vector<8x128xf32>
    %6 = vector.multi_reduction <add>, %5, %cst [0] : vector<2x8x128xf32> to vector<8x128xf32>
    %7 = arith.mulf %4, %4 : vector<2x8x128xf32>
    %cst_6 = arith.constant dense<0.000000e+00> : vector<8x128xf32>
    %8 = vector.multi_reduction <add>, %7, %cst_6 [0] : vector<2x8x128xf32> to vector<8x128xf32>
    %c2_i32 = arith.constant 2 : i32
    %9 = arith.muli %arg0, %c2_i32 : i32
    %10 = arith.addi %9, %arg1 : i32
    %c1024_i32 = arith.constant 1024 : i32
    %11 = arith.muli %10, %c1024_i32 : i32
    %c1024_i32_7 = arith.constant 1024 : i32
    %12 = arith.addi %11, %c1024_i32_7 : i32
    %c4000_i32 = arith.constant 4000 : i32
    %13 = arith.cmpi sgt, %12, %c4000_i32 : i32
    %true = arith.constant true
    %14 = arith.xori %13, %true : i1
    %15 = arith.extui %14 : i1 to i32
    %c0_i32_8 = arith.constant 0 : i32
    %16 = arith.cmpi ne, %15, %c0_i32_8 : i32
    scf.if %16 {
      %19 = arith.mulf %6, %6 : vector<8x128xf32>
      %c0_10 = arith.constant 0 : index
      %c0_11 = arith.constant 0 : index
      %c0_12 = arith.constant 0 : index
      %20 = vector.load %arg4[%c0_10, %c0_11, %c0_12] : memref<1x8x128xf32, #tpu.memory_space<vmem>>, vector<1x8x128xf32>
      %21 = vector.shape_cast %20 : vector<1x8x128xf32> to vector<8x128xf32>
      %22 = vector.shape_cast %19 : vector<8x128xf32> to vector<1x8x128xf32>
      %cst_13 = arith.constant dense<0.000000e+00> : vector<8x128xf32>
      %23 = vector.multi_reduction <add>, %22, %cst_13 [0] : vector<1x8x128xf32> to vector<8x128xf32>
      %24 = arith.addf %21, %23 : vector<8x128xf32>
      %c0_14 = arith.constant 0 : index
      %c0_15 = arith.constant 0 : index
      %c0_16 = arith.constant 0 : index
      %25 = vector.load %arg4[%c0_14, %c0_15, %c0_16] : memref<1x8x128xf32, #tpu.memory_space<vmem>>, vector<1x8x128xf32>
      %26 = vector.shape_cast %25 : vector<1x8x128xf32> to vector<8x128xf32>
      %27 = vector.shape_cast %24 : vector<8x128xf32> to vector<1x8x128xf32>
      tpu.vector_store %arg4[%c0_14, %c0_15, %c0_16], %27 {strides = array<i32>} : memref<1x8x128xf32, #tpu.memory_space<vmem>>, vector<1x8x128xf32>,
      %c0_17 = arith.constant 0 : index
      %c0_18 = arith.constant 0 : index
      %c0_19 = arith.constant 0 : index
      %28 = vector.load %arg5[%c0_17, %c0_18, %c0_19] : memref<1x8x128xf32, #tpu.memory_space<vmem>>, vector<1x8x128xf32>
      %29 = vector.shape_cast %28 : vector<1x8x128xf32> to vector<8x128xf32>
      %30 = vector.shape_cast %8 : vector<8x128xf32> to vector<1x8x128xf32>
      %cst_20 = arith.constant dense<0.000000e+00> : vector<8x128xf32>
      %31 = vector.multi_reduction <add>, %30, %cst_20 [0] : vector<1x8x128xf32> to vector<8x128xf32>
      %32 = arith.addf %29, %31 : vector<8x128xf32>
      %c0_21 = arith.constant 0 : index
      %c0_22 = arith.constant 0 : index
      %c0_23 = arith.constant 0 : index
      %33 = vector.load %arg5[%c0_21, %c0_22, %c0_23] : memref<1x8x128xf32, #tpu.memory_space<vmem>>, vector<1x8x128xf32>
      %34 = vector.shape_cast %33 : vector<1x8x128xf32> to vector<8x128xf32>
      %35 = vector.shape_cast %32 : vector<8x128xf32> to vector<1x8x128xf32>
      tpu.vector_store %arg5[%c0_21, %c0_22, %c0_23], %35 {strides = array<i32>} : memref<1x8x128xf32, #tpu.memory_space<vmem>>, vector<1x8x128xf32>,
    } else {
    }
    %17 = arith.extui %13 : i1 to i32
    %c0_i32_9 = arith.constant 0 : i32
    %18 = arith.cmpi ne, %17, %c0_i32_9 : i32
    scf.if %18 {
      %19 = tpu.iota {dimensions = array<i32: 0>} : vector<8x128xi32>
      %c128_i32 = arith.constant 128 : i32
      %20 = vector.broadcast %c128_i32 : i32 to vector<8x128xi32>
      %21 = arith.muli %19, %20 : vector<8x128xi32>
      %22 = vector.broadcast %11 : i32 to vector<8x128xi32>
      %23 = arith.addi %22, %21 : vector<8x128xi32>
      %24 = tpu.iota {dimensions = array<i32: 1>} : vector<8x128xi32>
      %25 = arith.addi %23, %24 : vector<8x128xi32>
      %c4000_i32_10 = arith.constant 4000 : i32
      %26 = vector.broadcast %c4000_i32_10 : i32 to vector<8x128xi32>
      %27 = arith.cmpi slt, %25, %26 : vector<8x128xi32>
      %cst_11 = arith.constant 0.000000e+00 : f32
      %28 = vector.broadcast %cst_11 : f32 to vector<8x128xf32>
      %29 = arith.select %27, %6, %28 : vector<8x128xi1>, vector<8x128xf32>
      %cst_12 = arith.constant 0.000000e+00 : f32
      %30 = vector.broadcast %cst_12 : f32 to vector<8x128xf32>
      %31 = arith.select %27, %8, %30 : vector<8x128xi1>, vector<8x128xf32>
      %32 = arith.mulf %29, %29 : vector<8x128xf32>
      %c0_13 = arith.constant 0 : index
      %c0_14 = arith.constant 0 : index
      %c0_15 = arith.constant 0 : index
      %33 = vector.load %arg4[%c0_13, %c0_14, %c0_15] : memref<1x8x128xf32, #tpu.memory_space<vmem>>, vector<1x8x128xf32>
      %34 = vector.shape_cast %33 : vector<1x8x128xf32> to vector<8x128xf32>
      %35 = vector.shape_cast %32 : vector<8x128xf32> to vector<1x8x128xf32>
      %cst_16 = arith.constant dense<0.000000e+00> : vector<8x128xf32>
      %36 = vector.multi_reduction <add>, %35, %cst_16 [0] : vector<1x8x128xf32> to vector<8x128xf32>
      %37 = arith.addf %34, %36 : vector<8x128xf32>
      %c0_17 = arith.constant 0 : index
      %c0_18 = arith.constant 0 : index
      %c0_19 = arith.constant 0 : index
      %38 = vector.load %arg4[%c0_17, %c0_18, %c0_19] : memref<1x8x128xf32, #tpu.memory_space<vmem>>, vector<1x8x128xf32>
      %39 = vector.shape_cast %38 : vector<1x8x128xf32> to vector<8x128xf32>
      %40 = vector.shape_cast %37 : vector<8x128xf32> to vector<1x8x128xf32>
      tpu.vector_store %arg4[%c0_17, %c0_18, %c0_19], %40 {strides = array<i32>} : memref<1x8x128xf32, #tpu.memory_space<vmem>>, vector<1x8x128xf32>,
      %c0_20 = arith.constant 0 : index
      %c0_21 = arith.constant 0 : index
      %c0_22 = arith.constant 0 : index
      %41 = vector.load %arg5[%c0_20, %c0_21, %c0_22] : memref<1x8x128xf32, #tpu.memory_space<vmem>>, vector<1x8x128xf32>
      %42 = vector.shape_cast %41 : vector<1x8x128xf32> to vector<8x128xf32>
      %43 = vector.shape_cast %31 : vector<8x128xf32> to vector<1x8x128xf32>
      %cst_23 = arith.constant dense<0.000000e+00> : vector<8x128xf32>
      %44 = vector.multi_reduction <add>, %43, %cst_23 [0] : vector<1x8x128xf32> to vector<8x128xf32>
      %45 = arith.addf %42, %44 : vector<8x128xf32>
      %c0_24 = arith.constant 0 : index
      %c0_25 = arith.constant 0 : index
      %c0_26 = arith.constant 0 : index
      %46 = vector.load %arg5[%c0_24, %c0_25, %c0_26] : memref<1x8x128xf32, #tpu.memory_space<vmem>>, vector<1x8x128xf32>
      %47 = vector.shape_cast %46 : vector<1x8x128xf32> to vector<8x128xf32>
      %48 = vector.shape_cast %45 : vector<8x128xf32> to vector<1x8x128xf32>
      tpu.vector_store %arg5[%c0_24, %c0_25, %c0_26], %48 {strides = array<i32>} : memref<1x8x128xf32, #tpu.memory_space<vmem>>, vector<1x8x128xf32>,
    } else {
    }
    return
  }
  func.func @transform_0(%arg0: i32, %arg1: i32) -> (i32, i32, i32) {
    %c2_i32 = arith.constant 2 : i32
    %0 = arith.muli %arg0, %c2_i32 : i32
    %1 = arith.addi %0, %arg1 : i32
    %c3_i32 = arith.constant 3 : i32
    %2 = arith.minsi %1, %c3_i32 : i32
    %c0_i32 = arith.constant 0 : i32
    %c0_i32_0 = arith.constant 0 : i32
    %c0_i32_1 = arith.constant 0 : i32
    return %c0_i32, %2, %c0_i32_0 : i32, i32, i32
  }
  func.func @transform_1(%arg0: i32, %arg1: i32) -> (i32, i32, i32) {
    %c2_i32 = arith.constant 2 : i32
    %0 = arith.muli %arg0, %c2_i32 : i32
    %1 = arith.addi %0, %arg1 : i32
    %c3_i32 = arith.constant 3 : i32
    %2 = arith.minsi %1, %c3_i32 : i32
    %c0_i32 = arith.constant 0 : i32
    %c0_i32_0 = arith.constant 0 : i32
    %c0_i32_1 = arith.constant 0 : i32
    return %c0_i32, %2, %c0_i32_0 : i32, i32, i32
  }
  func.func @transform_2(%arg0: i32, %arg1: i32) -> (i32, i32, i32) {
    %c0_i32 = arith.constant 0 : i32
    %c0_i32_0 = arith.constant 0 : i32
    %c0_i32_1 = arith.constant 0 : i32
    return %arg0, %c0_i32, %c0_i32_0 : i32, i32, i32
  }
  func.func @transform_3(%arg0: i32, %arg1: i32) -> (i32, i32, i32) {
    %c0_i32 = arith.constant 0 : i32
    %c0_i32_0 = arith.constant 0 : i32
    %c0_i32_1 = arith.constant 0 : i32
    return %arg0, %c0_i32, %c0_i32_0 : i32, i32, i32
  }
}

</mosaic_0001>

<llo_original>
// kernel: tpu_custom_call.1
$region0: #{tpu_custom_call.1}
  #allocation0 [shape = 'u32[]', space=smem, size = 0x4, offset = 0x4, fixed_abs, tag = 'smem constant byte address 0x4 - core index']
  #allocation1 [shape = 'u32[144,128]{1,0:T(1,128)}', space=vmem, size = 0x12000, scoped, tag = 'internal scratch']
  %s0 = inlined_call_operand.hbm [shape: f32[2,32,128], index: 0, kind: input, shape index: {}]
  %s1 = inlined_call_operand.hbm [shape: f32[2,32,128], index: 1, kind: input, shape index: {}]
  %s2 = inlined_call_operand.hbm [shape: f32[2,8,128], index: 2, kind: output, shape index: {0}]
  %s3 = inlined_call_operand.hbm [shape: f32[2,8,128], index: 3, kind: output, shape index: {1}]
  %4 = xla_tuple %s2, %s3
  %s5 = sld [smem:[#allocation0]]
  $region69: #{tpu_custom_call.1} parent=0
    _
  %s7 = ssub.s32 1, %s5
  %s8 = scalar_select 0, %s7, %s5
  $region1: #{tpu_custom_call.1} parent=0
    #allocation2 [shape = 'u8[16384]{0}', space=vmem, size = 0x4000, scoped, tag = 'input window, operand 0']
    #allocation3 [shape = 's32[2]{0}', space=sflag, size = 0x8, scoped, tag = 'scoped memory for tpu_custom_call.1']
    #allocation4 [shape = 's32[2]{0}', space=sflag, size = 0x8, scoped, tag = 'scoped memory for tpu_custom_call.1']
    #allocation5 [shape = 'u8[16384]{0}', space=vmem, size = 0x4000, scoped, tag = 'input window, operand 1']
    #allocation6 [shape = 's32[2]{0}', space=sflag, size = 0x8, scoped, tag = 'scoped memory for tpu_custom_call.1']
    #allocation7 [shape = 'u8[8192]{0}', space=vmem, size = 0x2000, scoped, tag = 'output window, operand 0']
    #allocation8 [shape = 'u8[8192]{0}', space=vmem, size = 0x2000, scoped, tag = 'output window, operand 1']
    #allocation9 [shape = 's32[2]{0}', space=sflag, size = 0x8, scoped, tag = 'scoped memory for tpu_custom_call.1']
    %9 = vsyncpa [#allocation3], 0
    %s10 = scalar_lea.sflag [#allocation3], 1
    %11 = vsyncpa %s10, 0
    %12 = vsyncpa [#allocation6], 0
    %s13 = scalar_lea.sflag [#allocation6], 1
    %14 = vsyncpa %s13, 0
    %15 = vsyncpa [#allocation4], 0
    %s16 = scalar_lea.sflag [#allocation4], 1
    %17 = vsyncpa %s16, 0
    %18 = vsyncpa [#allocation9], 0
    %s19 = scalar_lea.sflag [#allocation9], 1
    %20 = vsyncpa %s19, 0
    loop: start=0, step=1, limit=6
    $region2: #{tpu_custom_call.1} parent=1 // loop_pre_header
      _
    $region3: #{tpu_custom_call.1} parent=1 // loop_header
      %s22 = sphi 0, %s26
      %p23 = scmp.ge.s32.totalorder %s22, 6
      %s29 = sphi 0, %s41
      %s30 = sphi 0, %s37
      %s31 = sphi 0, %s29
      %s32 = sphi 0, %s30
      %s33 = sphi 0, %s31
      %s34 = sphi 0, %s32
      %s52 = sphi 0, %s54
      %s55 = sphi 0, %s52
      %s56 = sphi 0, %s55
      %s72 = sphi 0, %s56
      %s86 = sphi 0, %s88
      %s89 = sphi 0, %s86
      %s90 = sphi 0, %s89
      %s106 = sphi 0, %s90
      %s112 = sphi 0, %s114
      %s115 = sphi 0, %s112
      %s116 = sphi 0, %s115
      %s132 = sphi 0, %s116
      %s138 = sphi 0, %s140
      %s141 = sphi 0, %s138
      %s142 = sphi 0, %s141
      %s158 = sphi 0, %s142
    $region4: #{tpu_custom_call.1} parent=1 // loop_header_branch
      %25 = sbr.rel (%p23) target = $region8
    $region5: #{tpu_custom_call.1} parent=1 // loop_body
      %s27 = ssub.s32 %s22, 1
      %s28 = ssub.s32 %s22, 2
      %s35 = sadd.s32 1, %s30
      %p36 = scmp.ge.s32.totalorder %s35, 2
      %s37 = scalar_select %p36, 0, %s35
      %s38 = sadd.s32 1, %s29
      %s39 = scalar_select %p36, %s38, %s29
      %p40 = scmp.ge.s32.totalorder %s39, 2
      %s41 = scalar_select %p40, 0, %s39
      %s42 = smul.u32 %s29, 2
      %s43 = sadd.s32 %s42, %s30
      %p44 = scmp.lt.s32.totalorder %s43, 3
      %s45 = scalar_select %p44, %s43, 3
      %s46 = smul.u32 %s41, 2
      %s47 = sadd.s32 %s46, %s37
      %p48 = scmp.lt.s32.totalorder %s47, 3
      %s49 = scalar_select %p48, %s47, 3
      %s50 = ssub.s32 %s45, %s49
      %p51 = scmp.eq.s32.totalorder %s50, 0
      %s53 = sadd.s32 %s52, 1
      %s54 = scalar_select %p51, %s52, %s53
      %p57 = pneg %p51
      %p58 = scmp.eq.s32.totalorder %s22, 3
      %p59 = por %p57, %p58
      %p60 = scmp.ne.s32.totalorder %s52, %s55
      %p61 = scmp.eq.s32.totalorder %s22, 0
      %p62 = por %p60, %p61
      %p63 = scmp.ne.s32.totalorder %s52, %s55
      %p64 = scmp.eq.s32.totalorder %s27, 3
      %p65 = por %p63, %p64
      %p66 = scmp.ne.s32.totalorder %s55, %s56
      %p67 = scmp.eq.s32.totalorder %s27, 0
      %p68 = por %p66, %p67
      %p69 = scmp.ne.s32.totalorder %s55, %s56
      %p70 = scmp.eq.s32.totalorder %s28, 3
      %p71 = por %p69, %p70
      %p73 = scmp.ne.s32.totalorder %s56, %s72
      %p74 = scmp.eq.s32.totalorder %s28, 0
      %p75 = por %p73, %p74
      %s76 = smul.u32 %s29, 2
      %s77 = sadd.s32 %s76, %s30
      %p78 = scmp.lt.s32.totalorder %s77, 3
      %s79 = scalar_select %p78, %s77, 3
      %s80 = smul.u32 %s41, 2
      %s81 = sadd.s32 %s80, %s37
      %p82 = scmp.lt.s32.totalorder %s81, 3
      %s83 = scalar_select %p82, %s81, 3
      %s84 = ssub.s32 %s79, %s83
      %p85 = scmp.eq.s32.totalorder %s84, 0
      %s87 = sadd.s32 %s86, 1
      %s88 = scalar_select %p85, %s86, %s87
      %p91 = pneg %p85
      %p92 = scmp.eq.s32.totalorder %s22, 3
      %p93 = por %p91, %p92
      %p94 = scmp.ne.s32.totalorder %s86, %s89
      %p95 = scmp.eq.s32.totalorder %s22, 0
      %p96 = por %p94, %p95
      %p97 = scmp.ne.s32.totalorder %s86, %s89
      %p98 = scmp.eq.s32.totalorder %s27, 3
      %p99 = por %p97, %p98
      %p100 = scmp.ne.s32.totalorder %s89, %s90
      %p101 = scmp.eq.s32.totalorder %s27, 0
      %p102 = por %p100, %p101
      %p103 = scmp.ne.s32.totalorder %s89, %s90
      %p104 = scmp.eq.s32.totalorder %s28, 3
      %p105 = por %p103, %p104
      %p107 = scmp.ne.s32.totalorder %s90, %s106
      %p108 = scmp.eq.s32.totalorder %s28, 0
      %p109 = por %p107, %p108
      %s110 = ssub.s32 %s29, %s41
      %p111 = scmp.eq.s32.totalorder %s110, 0
      %s113 = sadd.s32 %s112, 1
      %s114 = scalar_select %p111, %s112, %s113
      %p117 = pneg %p111
      %p118 = scmp.eq.s32.totalorder %s22, 3
      %p119 = por %p117, %p118
      %p120 = scmp.ne.s32.totalorder %s112, %s115
      %p121 = scmp.eq.s32.totalorder %s22, 0
      %p122 = por %p120, %p121
      %p123 = scmp.ne.s32.totalorder %s112, %s115
      %p124 = scmp.eq.s32.totalorder %s27, 3
      %p125 = por %p123, %p124
      %p126 = scmp.ne.s32.totalorder %s115, %s116
      %p127 = scmp.eq.s32.totalorder %s27, 0
      %p128 = por %p126, %p127
      %p129 = scmp.ne.s32.totalorder %s115, %s116
      %p130 = scmp.eq.s32.totalorder %s28, 3
      %p131 = por %p129, %p130
      %p133 = scmp.ne.s32.totalorder %s116, %s132
      %p134 = scmp.eq.s32.totalorder %s28, 0
      %p135 = por %p133, %p134
      %s136 = ssub.s32 %s29, %s41
      %p137 = scmp.eq.s32.totalorder %s136, 0
      %s139 = sadd.s32 %s138, 1
      %s140 = scalar_select %p137, %s138, %s139
      %p143 = pneg %p137
      %p144 = scmp.eq.s32.totalorder %s22, 3
      %p145 = por %p143, %p144
      %p146 = scmp.ne.s32.totalorder %s138, %s141
      %p147 = scmp.eq.s32.totalorder %s22, 0
      %p148 = por %p146, %p147
      %p149 = scmp.ne.s32.totalorder %s138, %s141
      %p150 = scmp.eq.s32.totalorder %s27, 3
      %p151 = por %p149, %p150
      %p152 = scmp.ne.s32.totalorder %s141, %s142
      %p153 = scmp.eq.s32.totalorder %s27, 0
      %p154 = por %p152, %p153
      %p155 = scmp.ne.s32.totalorder %s141, %s142
      %p156 = scmp.eq.s32.totalorder %s28, 3
      %p157 = por %p155, %p156
      %p159 = scmp.ne.s32.totalorder %s142, %s158
      %p160 = scmp.eq.s32.totalorder %s28, 0
      %p161 = por %p159, %p160
      %p162 = scmp.le.s32.totalorder 1, %s22
      %p163 = scmp.lt.s32.totalorder %s22, 5
      %p164 = pnand %p162, %p163
      %p165 = pneg %p164
      // Predicated region
      $region9: #{tpu_custom_call.1} parent=5 // pred_check
        _
      $region10: #{tpu_custom_call.1} parent=5 // pred_check_branch
        %167 = sbr.rel (%p164) target = $region12
      $region11: #{tpu_custom_call.1} parent=5 // pred_region
        %s168 = ssub.s32 %s22, 1
      $region12: #{tpu_custom_call.1} parent=5 // pred_fallthru
        _
      %p169 = scmp.lt.s32.totalorder %s22, 4
      // Predicated region
      $region13: #{tpu_custom_call.1} parent=5 // pred_check
        %p170 = pneg %p169
      $region14: #{tpu_custom_call.1} parent=5 // pred_check_branch
        %172 = sbr.rel (%p170) target = $region16
      $region15: #{tpu_custom_call.1} parent=5 // pred_region
        // Predicated region
        $region17: #{tpu_custom_call.1} parent=15 // pred_check
          %p173 = pneg %p62
        $region18: #{tpu_custom_call.1} parent=15 // pred_check_branch
          %175 = sbr.rel (%p173) target = $region20
        $region19: #{tpu_custom_call.1} parent=15 // pred_region
          %s176 = sand.u32 %s52, 1
          %s177 = scalar_lea.sflag [#allocation3], %s176
          %s178 = sand.u32 %s52, 1
          %s179 = smul.addr %s178, 16
          %s180 = scalar_lea.vmem [#allocation2], %s179
          %s181 = smul.u32 %s29, 2
          %s182 = sadd.s32 %s181, %s30
          %p183 = scmp.lt.s32.totalorder %s182, 3
          %s184 = scalar_select %p183, %s182, 3
          %s186 = ssub.s32 256, 256
          %187 = vsyncadd %s177, %s186
          %s188 = smul.addr %s184, 128
          %s189 = scalar_lea.hbm %s0, %s188
          %s190 = sshll.u32 %s180, 4
          %s191 = int_to_ptr.vmem [resolvable:$true] %s190
          %196 = dma.hbm_to_vmem [thread:$0]  %s189, 256, %s191, %s177, 512, 128, 8
        $region20: #{tpu_custom_call.1} parent=15 // pred_fallthru
          _
        // Predicated region
        $region21: #{tpu_custom_call.1} parent=15 // pred_check
          %p197 = pneg %p96
        $region22: #{tpu_custom_call.1} parent=15 // pred_check_branch
          %199 = sbr.rel (%p197) target = $region24
        $region23: #{tpu_custom_call.1} parent=15 // pred_region
          %s200 = sand.u32 %s86, 1
          %s201 = scalar_lea.sflag [#allocation6], %s200
          %s202 = sand.u32 %s86, 1
          %s203 = smul.addr %s202, 16
          %s204 = scalar_lea.vmem [#allocation5], %s203
          %s205 = smul.u32 %s29, 2
          %s206 = sadd.s32 %s205, %s30
          %p207 = scmp.lt.s32.totalorder %s206, 3
          %s208 = scalar_select %p207, %s206, 3
          %s210 = ssub.s32 256, 256
          %211 = vsyncadd %s201, %s210
          %s212 = smul.addr %s208, 128
          %s213 = scalar_lea.hbm %s1, %s212
          %s214 = sshll.u32 %s204, 4
          %s215 = int_to_ptr.vmem [resolvable:$true] %s214
          %220 = dma.hbm_to_vmem [thread:$0]  %s213, 256, %s215, %s201, 512, 128, 8
        $region24: #{tpu_custom_call.1} parent=15 // pred_fallthru
          _
      $region16: #{tpu_custom_call.1} parent=5 // pred_fallthru
        _
      %p221 = scmp.le.s32.totalorder 1, %s22
      %p222 = scmp.lt.s32.totalorder %s22, 5
      %p223 = pnand %p221, %p222
      %p224 = pneg %p223
      // Predicated region
      $region25: #{tpu_custom_call.1} parent=5 // pred_check
        _
      $region26: #{tpu_custom_call.1} parent=5 // pred_check_branch
        %226 = sbr.rel (%p223) target = $region28
      $region27: #{tpu_custom_call.1} parent=5 // pred_region
        %s227 = ssub.s32 %s22, 1
        %s228 = sand.u32 %s55, 1
        %s229 = scalar_lea.sflag [#allocation3], %s228
        %s230 = sand.u32 %s55, 1
        %s231 = smul.addr %s230, 16
        %s232 = scalar_lea.vmem [#allocation2], %s231
        // Predicated region
        $region29: #{tpu_custom_call.1} parent=27 // pred_check
          %p233 = pneg %p68
        $region30: #{tpu_custom_call.1} parent=27 // pred_check_branch
          %235 = sbr.rel (%p233) target = $region32
        $region31: #{tpu_custom_call.1} parent=27 // pred_region
          %236 = dma.done %s229, 256
        $region32: #{tpu_custom_call.1} parent=27 // pred_fallthru
          _
        %s237 = sand.u32 %s89, 1
        %s238 = scalar_lea.sflag [#allocation6], %s237
        %s239 = sand.u32 %s89, 1
        %s240 = smul.addr %s239, 16
        %s241 = scalar_lea.vmem [#allocation5], %s240
        // Predicated region
        $region33: #{tpu_custom_call.1} parent=27 // pred_check
          %p242 = pneg %p102
        $region34: #{tpu_custom_call.1} parent=27 // pred_check_branch
          %244 = sbr.rel (%p242) target = $region36
        $region35: #{tpu_custom_call.1} parent=27 // pred_region
          %245 = dma.done %s238, 256
        $region36: #{tpu_custom_call.1} parent=27 // pred_fallthru
          _
        %s246 = sand.u32 %s55, 1
        %s247 = scalar_lea.sflag [#allocation3], %s246
        %s248 = sand.u32 %s55, 1
        %s249 = smul.addr %s248, 16
        %s250 = scalar_lea.vmem [#allocation2], %s249
        %p251 = pneg %p68
        %p252 = pneg %p65
        %s253 = sand.u32 %s89, 1
        %s254 = scalar_lea.sflag [#allocation6], %s253
        %s255 = sand.u32 %s89, 1
        %s256 = smul.addr %s255, 16
        %s257 = scalar_lea.vmem [#allocation5], %s256
        %p258 = pneg %p102
        %p259 = pneg %p99
        %p260 = pneg %p128
        %p261 = pneg %p125
        %s262 = sand.u32 %s115, 1
        %s263 = scalar_lea.sflag [#allocation4], %s262
        %s264 = sand.u32 %s115, 1
        %s265 = smul.addr %s264, 8
        %s266 = scalar_lea.vmem [#allocation7], %s265
        %p267 = pneg %p154
        %p268 = pneg %p151
        %s269 = sand.u32 %s141, 1
        %s270 = scalar_lea.sflag [#allocation9], %s269
        %s271 = sand.u32 %s141, 1
        %s272 = smul.addr %s271, 8
        %s273 = scalar_lea.vmem [#allocation8], %s272
        %s274 = smul.u32 %s31, 2
        %s275 = sadd.s32 %s274, %s32
        %p276 = scmp.lt.s32.totalorder %s275, 3
        %s277 = scalar_select %p276, %s275, 3
        %s278 = smul.u32 %s31, 2
        %s279 = sadd.s32 %s278, %s32
        %p280 = scmp.lt.s32.totalorder %s279, 3
        %s281 = scalar_select %p280, %s279, 3
        %p282 = scmp.eq.s32.totalorder %s32, 0
        // Predicated region
        $region37: #{tpu_custom_call.1} parent=27 // pred_check
          %p283 = pneg %p282
        $region38: #{tpu_custom_call.1} parent=27 // pred_check_branch
          %285 = sbr.rel (%p283) target = $region40
        $region39: #{tpu_custom_call.1} parent=27 // pred_region
          %286 = vst [vmem:[%s266] sm:$0xff] 0.0
          %287 = vst [vmem:[%s273] sm:$0xff] 0.0
        $region40: #{tpu_custom_call.1} parent=27 // pred_fallthru
          _
        %v288 = vld [vmem:[%s232] sm:$0xff]
        %v289 = vld [vmem:[%s232 + $0x8] sm:$0xff]
        %v290 = vld [vmem:[%s241] sm:$0xff]
        %v291 = vld [vmem:[%s241 + $0x8] sm:$0xff]
        %v292 = vsub.f32 %v290, %v288
        %v293 = vsub.f32 %v291, %v289
        %v294 = vadd.f32 %v292, %v293
        %v295 = vmul.f32 %v290, %v290
        %v296 = vmul.f32 %v291, %v291
        %v297 = vadd.f32 %v295, %v296
        %s298 = smul.u32 %s31, 2
        %s299 = sadd.s32 %s298, %s32
        %s300 = smul.u32 %s299, 1024
        %s301 = sadd.s32 %s300, 1024
        %p302 = scmp.gt.s32.totalorder %s301, 4000
        %p303 = scmp.le.s32.totalorder %s301, 4000
        // Predicated region
        $region41: #{tpu_custom_call.1} parent=27 // pred_check
          %p304 = pneg %p303
        $region42: #{tpu_custom_call.1} parent=27 // pred_check_branch
          %306 = sbr.rel (%p304) target = $region44
        $region43: #{tpu_custom_call.1} parent=27 // pred_region
          %v307 = vmul.f32 %v294, %v294
          %v308 = vld [vmem:[%s266] sm:$0xff]
          %v309 = vadd.f32 %v307, 0.0
          %v310 = vadd.f32 %v308, %v309
          %311 = vst [vmem:[%s266] sm:$0xff] %v310
          %v312 = vld [vmem:[%s273] sm:$0xff]
          %v313 = vadd.f32 %v297, 0.0
          %v314 = vadd.f32 %v312, %v313
          %315 = vst [vmem:[%s273] sm:$0xff] %v314
        $region44: #{tpu_custom_call.1} parent=27 // pred_fallthru
          _
        // Predicated region
        $region45: #{tpu_custom_call.1} parent=27 // pred_check
          %p316 = pneg %p302
        $region46: #{tpu_custom_call.1} parent=27 // pred_check_branch
          %318 = sbr.rel (%p316) target = $region48
        $region47: #{tpu_custom_call.1} parent=27 // pred_region
          %v319 = vlaneseq
          %v320 = vshrl.u32 %v319, 7
          %v321 = vmul.u32 %v320, 128
          %v322 = vstv %s300
          %v323 = vadd.s32 %v322, %v321
          %v324 = vlaneseq
          %v325 = vand.u32 %v324, 127
          %v326 = vadd.s32 %v323, %v325
          %vm327 = vcmp.lt.s32.totalorder %v326, 4000
          %v328 = vsel %vm327, %v294, 0.0
          %v329 = vsel %vm327, %v297, 0.0
          %v330 = vmul.f32 %v328, %v328
          %v331 = vld [vmem:[%s266] sm:$0xff]
          %v332 = vadd.f32 %v330, 0.0
          %v333 = vadd.f32 %v331, %v332
          %334 = vst [vmem:[%s266] sm:$0xff] %v333
          %v335 = vld [vmem:[%s273] sm:$0xff]
          %v336 = vadd.f32 %v329, 0.0
          %v337 = vadd.f32 %v335, %v336
          %338 = vst [vmem:[%s273] sm:$0xff] %v337
        $region48: #{tpu_custom_call.1} parent=27 // pred_fallthru
          _
        %s339 = sand.u32 %s115, 1
        %s340 = scalar_lea.sflag [#allocation4], %s339
        %s341 = sand.u32 %s115, 1
        %s342 = smul.addr %s341, 8
        %s343 = scalar_lea.vmem [#allocation7], %s342
        %s344 = sand.u32 %s141, 1
        %s345 = scalar_lea.sflag [#allocation9], %s344
        %s346 = sand.u32 %s141, 1
        %s347 = smul.addr %s346, 8
        %s348 = scalar_lea.vmem [#allocation8], %s347
        // Predicated region
        $region49: #{tpu_custom_call.1} parent=27 // pred_check
          %p349 = pneg %p125
        $region50: #{tpu_custom_call.1} parent=27 // pred_check_branch
          %351 = sbr.rel (%p349) target = $region52
        $region51: #{tpu_custom_call.1} parent=27 // pred_region
          %s353 = ssub.s32 128, 128
          %354 = vsyncadd %s340, %s353
          %s355 = smul.addr %s31, 128
          %s356 = scalar_lea.hbm %s2, %s355
          %s358 = sshll.u32 %s343, 4
          %s359 = int_to_ptr.vmem [resolvable:$true] %s358
          %361 = dma.vmem_to_hbm [thread:$0]  %s359, 128, %s356, %s340
        $region52: #{tpu_custom_call.1} parent=27 // pred_fallthru
          _
        // Predicated region
        $region53: #{tpu_custom_call.1} parent=27 // pred_check
          %p362 = pneg %p151
        $region54: #{tpu_custom_call.1} parent=27 // pred_check_branch
          %364 = sbr.rel (%p362) target = $region56
        $region55: #{tpu_custom_call.1} parent=27 // pred_region
          %s366 = ssub.s32 128, 128
          %367 = vsyncadd %s345, %s366
          %s368 = smul.addr %s31, 128
          %s369 = scalar_lea.hbm %s3, %s368
          %s371 = sshll.u32 %s348, 4
          %s372 = int_to_ptr.vmem [resolvable:$true] %s371
          %374 = dma.vmem_to_hbm [thread:$0]  %s372, 128, %s369, %s345
        $region56: #{tpu_custom_call.1} parent=27 // pred_fallthru
          _
      $region28: #{tpu_custom_call.1} parent=5 // pred_fallthru
        _
      %p375 = scmp.le.s32.totalorder 2, %s22
      // Predicated region
      $region57: #{tpu_custom_call.1} parent=5 // pred_check
        %p376 = pneg %p375
      $region58: #{tpu_custom_call.1} parent=5 // pred_check_branch
        %378 = sbr.rel (%p376) target = $region60
      $region59: #{tpu_custom_call.1} parent=5 // pred_region
        %s379 = ssub.s32 %s22, 2
        // Predicated region
        $region61: #{tpu_custom_call.1} parent=59 // pred_check
          %p380 = pneg %p131
        $region62: #{tpu_custom_call.1} parent=59 // pred_check_branch
          %382 = sbr.rel (%p380) target = $region64
        $region63: #{tpu_custom_call.1} parent=59 // pred_region
          %s383 = sand.u32 %s116, 1
          %s384 = scalar_lea.sflag [#allocation4], %s383
          %s385 = sand.u32 %s116, 1
          %s386 = smul.addr %s385, 8
          %s387 = scalar_lea.vmem [#allocation7], %s386
          %388 = dma.done %s384, 128
        $region64: #{tpu_custom_call.1} parent=59 // pred_fallthru
          _
        // Predicated region
        $region65: #{tpu_custom_call.1} parent=59 // pred_check
          %p389 = pneg %p157
        $region66: #{tpu_custom_call.1} parent=59 // pred_check_branch
          %391 = sbr.rel (%p389) target = $region68
        $region67: #{tpu_custom_call.1} parent=59 // pred_region
          %s392 = sand.u32 %s142, 1
          %s393 = scalar_lea.sflag [#allocation9], %s392
          %s394 = sand.u32 %s142, 1
          %s395 = smul.addr %s394, 8
          %s396 = scalar_lea.vmem [#allocation8], %s395
          %397 = dma.done %s393, 128
        $region68: #{tpu_custom_call.1} parent=59 // pred_fallthru
          _
      $region60: #{tpu_custom_call.1} parent=5 // pred_fallthru
        _
    $region6: #{tpu_custom_call.1} parent=1 // loop_footer
      %s26 = sadd.s32 1, %s22
    $region7: #{tpu_custom_call.1} parent=1 // loop_footer_branch
      %21 = sbr.rel target = $region3
    $region8: #{tpu_custom_call.1} parent=1 // loop_exit
      _
    %398 = vsyncpa [#allocation3], 1
    %s399 = scalar_lea.sflag [#allocation3], 1
    %400 = vsyncpa %s399, 1
    %401 = vsyncpa [#allocation6], 1
    %s402 = scalar_lea.sflag [#allocation6], 1
    %403 = vsyncpa %s402, 1
    %404 = vsyncpa [#allocation4], 1
    %s405 = scalar_lea.sflag [#allocation4], 1
    %406 = vsyncpa %s405, 1
    %407 = vsyncpa [#allocation9], 1
    %s408 = scalar_lea.sflag [#allocation9], 1
    %409 = vsyncpa %s408, 1

</llo_original>
